<compile_context>
chip_gen: v7x
topology: tpu7x:2x2x1
jax: 0.10.0
libtpu: 0.0.40
codegen_flags: <defaults>
</compile_context>

<pallas_src>
import functools

import jax
import jax.numpy as jnp
from jax.experimental import pallas as pl
from jax.experimental.pallas import tpu as pltpu


def _round_up(x: int, m: int) -> int:
    return (x + m - 1) // m * m


def _dropout2d_kernel(mask_ref, x_ref, o_ref, *, tile_rows, resident_mask):
    """mask: per-(batch, channel) keep*scale factor; pure broadcast multiply."""
    if resident_mask:
        r0 = pl.multiple_of(pl.program_id(0) * tile_rows, tile_rows)
        m = mask_ref[pl.ds(r0, tile_rows), :]
    else:
        m = mask_ref[...]
    o_ref[...] = x_ref[...] * m


def _vmem_budget():
    """(per-buffer target bytes, scoped VMEM limit) tuned per TPU generation."""
    try:
        kind = jax.devices()[0].device_kind.lower()
    except Exception:  # pragma: no cover - defensive only
        kind = ""
    if "v5" in kind or "v6" in kind:      # 128 MiB physical VMEM parts
        return 8 * 1024 * 1024, 64 * 1024 * 1024
    return 4 * 1024 * 1024, 32 * 1024 * 1024   # v7x (64 MiB) / unknown


def _pick_tiles(rows, cols, itemsize, target_bytes):
    # Sublane pack: 8 for f32, 16 for bf16, 32 for int8/fp8.
    pack = max(8, 32 // itemsize)

    # Lane (cols) tiling only when a pack-row stripe of the full width would
    # already blow the per-buffer target (segmentation-sized planes).
    if cols * pack * itemsize <= target_bytes:
        tile_cols = cols
    else:
        tile_cols = max(128, (target_bytes // (pack * itemsize)) // 128 * 128)

    tile_rows = max(pack, (target_bytes // (tile_cols * itemsize)) // pack * pack)
    # Keep >=2 row tiles whenever possible so the "parallel" row axis can be
    # sharded across v7x's two TensorCores.
    if rows > pack:
        tile_rows = min(tile_rows, _round_up(-(-rows // 2), pack))
    if tile_rows >= rows:
        tile_rows = rows          # full-extent block is always legal
    return tile_rows, tile_cols


def _mask_multiply(x2, mask, *, donate=False):
    """out[r, c] = x2[r, c] * mask[r, 0], streamed through VMEM."""
    rows, cols = x2.shape
    itemsize = x2.dtype.itemsize
    target_bytes, vmem_limit = _vmem_budget()
    tile_rows, tile_cols = _pick_tiles(rows, cols, itemsize, target_bytes)

    grid = (pl.cdiv(rows, tile_rows), pl.cdiv(cols, tile_cols))
    rows_pad = grid[0] * tile_rows

    # A (rows, 1) mask lane-pads to 128 lanes in VMEM; keep the whole mask
    # resident (fetched once, constant index_map) unless that footprint gets
    # large, then fall back to per-row-tile blocks.
    mask_vmem_bytes = rows_pad * 128 * itemsize
    resident = mask_vmem_bytes <= 4 * 1024 * 1024

    if rows_pad != rows:
        # Only the tiny (rows, 1) mask is padded; the activation never is.
        mask = jnp.pad(mask, ((0, rows_pad - rows), (0, 0)))

    if resident:
        mask_spec = pl.BlockSpec((rows_pad, 1), lambda i, j: (0, 0))
    else:
        mask_spec = pl.BlockSpec((tile_rows, 1), lambda i, j: (i, 0))

    kernel = functools.partial(
        _dropout2d_kernel, tile_rows=tile_rows, resident_mask=resident)

    return pl.pallas_call(
        kernel,
        out_shape=jax.ShapeDtypeStruct((rows, cols), x2.dtype),
        grid=grid,
        in_specs=[
            mask_spec,
            pl.BlockSpec((tile_rows, tile_cols), lambda i, j: (i, j)),
        ],
        out_specs=pl.BlockSpec((tile_rows, tile_cols), lambda i, j: (i, j)),
        input_output_aliases=({1: 0} if donate else {}),
        cost_estimate=pl.CostEstimate(
            flops=rows * cols,
            transcendentals=0,
            bytes_accessed=2 * rows * cols * itemsize + mask_vmem_bytes,
        ),
        compiler_params=pltpu.CompilerParams(
            dimension_semantics=("parallel", "parallel"),
            vmem_limit_bytes=vmem_limit,
        ),
    )(mask, x2)


# custom_vjp so jax.grad through training-mode dropout works; the backward
# pass is the identical mask-multiply kernel applied to the cotangent.
@jax.custom_vjp
def _apply_channel_mask(x2, mask):
    return _mask_multiply(x2, mask)


def _apply_channel_mask_fwd(x2, mask):
    return _mask_multiply(x2, mask), mask


def _apply_channel_mask_bwd(mask, g):
    return _mask_multiply(g, mask), jnp.zeros_like(mask)


_apply_channel_mask.defvjp(_apply_channel_mask_fwd, _apply_channel_mask_bwd)


def enh_dropout(x: jax.Array, *, prob: float = 0.5, training: bool = True,
                key: jax.Array | None = None, donate: bool = False) -> jax.Array:
    """JAX/Pallas equivalent of EnhDropout.forward (NCHW input)."""
    if not training or prob == 0.0:
        return x                       # eval-mode / no-op forward is identity
    if prob >= 1.0:
        return jnp.zeros_like(x)       # PyTorch drops everything at p == 1
    if key is None:
        raise ValueError(
            "enh_dropout: a PRNG key is required in training mode, otherwise "
            "the channel-dropout mask repeats on every call.")

    N, C, H, W = x.shape
    rows, cols = N * C, H * W
    x2 = x.reshape(rows, cols)

    # Channel-wise keep decision + survivor scaling, computed once per call.
    keep = jax.random.bernoulli(key, p=1.0 - prob, shape=(rows, 1))
    scale = jnp.asarray(1.0 / (1.0 - prob), dtype=x.dtype)
    mask = jnp.where(keep, scale, jnp.zeros((), dtype=x.dtype)).astype(x.dtype)

    if donate:
        # Caller promises not to reuse x; alias the activation into the output
        # (no gradient support on this path).
        out2 = _mask_multiply(x2, mask, donate=True)
    else:
        out2 = _apply_channel_mask(x2, mask)
    return out2.reshape(N, C, H, W)


if __name__ == "__main__":
    key = jax.random.PRNGKey(0)
    xkey, dkey = jax.random.split(key)

    # Small NCHW input: batch=2, channels=4, spatial=16x16 (lane dim 256).
    x = jax.random.normal(xkey, (2, 4, 16, 16), dtype=jnp.float32)

    # Training path (the hot path implemented in the kernel).
    y_train = jax.block_until_ready(
        enh_dropout(x, prob=0.5, training=True, key=dkey))

    # Sanity: every (n, c) plane is either all-zero or exactly 2*x.
    planes = y_train.reshape(2 * 4, -1)
    xplanes = x.reshape(2 * 4, -1)
    for r in range(planes.shape[0]):
        row = planes[r]
        if bool(jnp.all(row == 0.0)):
            continue
        assert bool(jnp.allclose(row, 2.0 * xplanes[r], atol=1e-6)), "bad scaling"

    # Eval path is identity.
    y_eval = jax.block_until_ready(enh_dropout(x, prob=0.5, training=False))
    assert bool(jnp.array_equal(y_eval, x)), "eval path must be identity"

    # prob == 1 drops everything.
    y_all = jax.block_until_ready(
        enh_dropout(x, prob=1.0, training=True, key=dkey))
    assert bool(jnp.all(y_all == 0.0)), "prob=1 must zero everything"

    # Gradient path exercises the custom_vjp (same kernel in the bwd pass).
    g = jax.grad(
        lambda xx: enh_dropout(xx, prob=0.5, training=True, key=dkey).sum())(x)
    g = jax.block_until_ready(g)
    assert bool(jnp.allclose(g * x, y_train, atol=1e-6)), "bad custom_vjp"

    print("KERNEL_OK")
</pallas_src>

<mosaic_0001>
module attributes {stable_mosaic.version = 11 : i64} {
  func.func @_dropout2d_kernel(%arg0: i32, %arg1: i32, %arg2: memref<8x1xf32, #tpu.memory_space<vmem>>, %arg3: memref<8x256xf32, #tpu.memory_space<vmem>>, %arg4: memref<8x256xf32, #tpu.memory_space<vmem>>) attributes {dimension_semantics = [#tpu.dimension_semantics<parallel>, #tpu.dimension_semantics<parallel>], iteration_bounds = array<i64: 1, 1>, scalar_prefetch = 0 : i64, scratch_operands = 0 : i64, tpu.core_type = #tpu.core_type<tc>, window_params = [{pipeline_mode = #tpu.pipeline_mode<synchronous>, transform_indices = @transform_0, window_bounds = array<i64: 8, 1>}, {transform_indices = @transform_1, window_bounds = array<i64: 8, 256>}, {transform_indices = @transform_2, window_bounds = array<i64: 8, 256>}]} {
    %c8_i32 = arith.constant 8 : i32
    %0 = arith.muli %arg0, %c8_i32 : i32
    %1 = tpu.assume_multiple %0, 8 : i32
    %2 = arith.index_cast %1 : i32 to index
    %c0 = arith.constant 0 : index
    %3 = vector.load %arg2[%2, %c0] : memref<8x1xf32, #tpu.memory_space<vmem>>, vector<8x1xf32>
    %c0_0 = arith.constant 0 : index
    %c0_1 = arith.constant 0 : index
    %4 = vector.load %arg3[%c0_0, %c0_1] : memref<8x256xf32, #tpu.memory_space<vmem>>, vector<8x256xf32>
    %5 = vector.broadcast %3 : vector<8x1xf32> to vector<8x256xf32>
    %6 = arith.mulf %4, %5 : vector<8x256xf32>
    %c0_2 = arith.constant 0 : index
    %c0_3 = arith.constant 0 : index
    %7 = vector.load %arg4[%c0_2, %c0_3] : memref<8x256xf32, #tpu.memory_space<vmem>>, vector<8x256xf32>
    tpu.vector_store %arg4[%c0_2, %c0_3], %6 {strides = array<i32>} : memref<8x256xf32, #tpu.memory_space<vmem>>, vector<8x256xf32>,
    return
  }
  func.func @transform_0(%arg0: i32, %arg1: i32) -> (i32, i32) {
    %c0_i32 = arith.constant 0 : i32
    %c0_i32_0 = arith.constant 0 : i32
    %c0_i32_1 = arith.constant 0 : i32
    return %c0_i32, %c0_i32_0 : i32, i32
  }
  func.func @transform_1(%arg0: i32, %arg1: i32) -> (i32, i32) {
    %c0_i32 = arith.constant 0 : i32
    return %arg0, %arg1 : i32, i32
  }
  func.func @transform_2(%arg0: i32, %arg1: i32) -> (i32, i32) {
    %c0_i32 = arith.constant 0 : i32
    return %arg0, %arg1 : i32, i32
  }
}

</mosaic_0001>

<llo_original>
// kernel: tpu_custom_call.1
$region0: #{tpu_custom_call.1}
  #allocation0 [shape = 'u32[]', space=smem, size = 0x4, offset = 0x4, fixed_abs, tag = 'smem constant byte address 0x4 - core index']
  #allocation1 [shape = 'u32[144,128]{1,0:T(1,128)}', space=vmem, size = 0x12000, scoped, tag = 'internal scratch']
  %s0 = inlined_call_operand.vmem [shape: f32[8,1], index: 0, kind: input, shape index: {}]
  %s1 = inlined_call_operand.hbm [shape: f32[8,256], index: 1, kind: input, shape index: {}]
  %s2 = inlined_call_operand.hbm [shape: f32[8,256], index: 2, kind: output, shape index: {}]
  %s3 = sld [smem:[#allocation0]]
  $region22: #{tpu_custom_call.1} parent=0
    _
  %s5 = ssub.s32 1, %s3
  %s6 = scalar_select 0, %s5, %s3
  $region1: #{tpu_custom_call.1} parent=0
    #allocation2 [shape = 'u8[8192]{0}', space=vmem, size = 0x2000, scoped, tag = 'input window, operand 1, single buffered']
    #allocation3 [shape = 's32[1]{0}', space=sflag, size = 0x4, scoped, tag = 'scoped memory for tpu_custom_call.1']
    #allocation4 [shape = 's32[1]{0}', space=sflag, size = 0x4, scoped, tag = 'scoped memory for tpu_custom_call.1']
    #allocation5 [shape = 'u8[8192]{0}', space=vmem, size = 0x2000, scoped, tag = 'output window, operand 0, single buffered']
    %7 = vsyncpa [#allocation3], 0
    %8 = vsyncpa [#allocation4], 0
    // Predicated region
    $region2: #{tpu_custom_call.1} parent=1 // pred_check
      _
    $region3: #{tpu_custom_call.1} parent=1 // pred_check_branch
      %10 = sbr.rel (0) target = $region5
    $region4: #{tpu_custom_call.1} parent=1 // pred_region
      _
    $region5: #{tpu_custom_call.1} parent=1 // pred_fallthru
      _
    // Predicated region
    $region6: #{tpu_custom_call.1} parent=1 // pred_check
      _
    $region7: #{tpu_custom_call.1} parent=1 // pred_check_branch
      %12 = sbr.rel (0) target = $region9
    $region8: #{tpu_custom_call.1} parent=1 // pred_region
      %s14 = ssub.s32 256, 256
      %15 = vsyncadd [#allocation3], %s14
      %s17 = sshll.u32 [#allocation2], 4
      %s18 = int_to_ptr.vmem [resolvable:$true] %s17
      %20 = dma.hbm_to_vmem [thread:$0]  %s1, 256, %s18, [#allocation3]
    $region9: #{tpu_custom_call.1} parent=1 // pred_fallthru
      _
    // Predicated region
    $region10: #{tpu_custom_call.1} parent=1 // pred_check
      _
    $region11: #{tpu_custom_call.1} parent=1 // pred_check_branch
      %22 = sbr.rel (0) target = $region13
    $region12: #{tpu_custom_call.1} parent=1 // pred_region
      %23 = dma.done [#allocation3], 256
    $region13: #{tpu_custom_call.1} parent=1 // pred_fallthru
      _
    %s24 = smul.u32 0, 8
    %s25 = scalar_lea.vmem %s0, %s24
    %v26 = vld [vmem:[%s25] sm:$0xff]
    %v27 = vld [vmem:[#allocation2] sm:$0xff]
    %v28 = vld [vmem:[#allocation2 + $0x8] sm:$0xff]
    %30 = vset.pattern.permute.xlu0 0
    %31 = vperm.xlu0 %30, %v26
    %v32 = vpop.permute.xlu0 %31
    %v34 = vmul.f32 %v27, %v32
    %v35 = vmul.f32 %v28, %v32
    %36 = vst [vmem:[#allocation5] sm:$0xff] %v34
    %37 = vst [vmem:[#allocation5 + $0x8] sm:$0xff] %v35
    // Predicated region
    $region14: #{tpu_custom_call.1} parent=1 // pred_check
      _
    $region15: #{tpu_custom_call.1} parent=1 // pred_check_branch
      %39 = sbr.rel (0) target = $region17
    $region16: #{tpu_custom_call.1} parent=1 // pred_region
      %s41 = ssub.s32 256, 256
      %42 = vsyncadd [#allocation4], %s41
      %s44 = sshll.u32 [#allocation5], 4
      %s45 = int_to_ptr.vmem [resolvable:$true] %s44
      %47 = dma.vmem_to_hbm [thread:$0]  %s45, 256, %s2, [#allocation4]
    $region17: #{tpu_custom_call.1} parent=1 // pred_fallthru
      _
    // Predicated region
    $region18: #{tpu_custom_call.1} parent=1 // pred_check
      _
    $region19: #{tpu_custom_call.1} parent=1 // pred_check_branch
      %49 = sbr.rel (0) target = $region21
    $region20: #{tpu_custom_call.1} parent=1 // pred_region
      %50 = dma.done [#allocation4], 256
    $region21: #{tpu_custom_call.1} parent=1 // pred_fallthru
      _
    %51 = vsyncpa [#allocation3], 1
    %52 = vsyncpa [#allocation4], 1

</llo_original>
